<compile_context>
chip_gen: v7x
topology: tpu7x:2x2x1
jax: 0.10.0
libtpu: 0.0.40
codegen_flags: <defaults>
</compile_context>

<pallas_src>
import functools

import jax
import jax.numpy as jnp
import numpy as np
from jax.experimental import pallas as pl
from jax.experimental.pallas import tpu as pltpu

_LANE = 128


def _project_depth_kernel(p_ref, pts_ref, out_ref, *, eps, unit_w):
    """p_ref:   (B*12,) f32 in SMEM -- pre-scaled projection matrices, row-major
                per batch: [x-row(4), y-row(4), z-row(4)]; x/y rows already
                include the 2/(W-1), 2/(H-1) pixel normalisation.
       pts_ref: (1, 3, ts, 128) point planes (X, Y, Z) when unit_w,
                (1, 4, ts, 128) (X, Y, Z, W) otherwise.
       out_ref: (1, 2, ts, 128) normalised pixel coords (x, y), channel-first."""
    b = pl.program_id(0)
    base = b * 12

    x_pl = pts_ref[0, 0]          # (ts, 128)
    y_pl = pts_ref[0, 1]
    z_pl = pts_ref[0, 2]

    def p(i):
        return p_ref[base + i]    # scalar load from SMEM

    if unit_w:
        # w == 1 assumed: the translation column is a scalar add and the
        # constant w plane is never read from HBM (25% less input traffic).
        cam_z = (p(8) * x_pl + p(9) * y_pl + p(10) * z_pl) + (p(11) + eps)
        cam_x = (p(0) * x_pl + p(1) * y_pl + p(2) * z_pl) + p(3)
        cam_y = (p(4) * x_pl + p(5) * y_pl + p(6) * z_pl) + p(7)
    else:
        w_pl = pts_ref[0, 3]
        cam_z = (p(8) * x_pl + p(9) * y_pl + p(10) * z_pl + p(11) * w_pl) + eps
        cam_x = p(0) * x_pl + p(1) * y_pl + p(2) * z_pl + p(3) * w_pl
        cam_y = p(4) * x_pl + p(5) * y_pl + p(6) * z_pl + p(7) * w_pl

    inv_z = pl.reciprocal(cam_z, approx=False)      # exact; EUP slot is free
    out_ref[0, 0] = (cam_x * inv_z - 1.0).astype(out_ref.dtype)
    out_ref[0, 1] = (cam_y * inv_z - 1.0).astype(out_ref.dtype)


def _pick_tile(S, rows_cap, min_s_blocks):
    """Choose (ts, s_pad): sublane tile and (possibly padded) sublane count.

    Preference order:
      1. largest multiple-of-8 divisor of S, <= rows_cap, yielding
         >= min_s_blocks grid steps                      -> no padding
      2. the full S as a single block (legal for any S)  -> no padding
      3. largest multiple-of-8 divisor of S <= rows_cap  -> no padding
      4. pad S up to a multiple of rows_cap              -> padding fallback
    """
    divisors = [d for d in range(8, min(S, rows_cap) + 1, 8) if S % d == 0]
    multi = [d for d in divisors if S // d >= min_s_blocks]
    if multi:
        return max(multi), S
    if S <= rows_cap:
        return int(S), int(S)
    if divisors:
        return max(divisors), int(S)
    ts = int(rows_cap)
    return ts, int(-(-S // ts) * ts)


def project_depth(points, K, T, *, height, width, eps=1e-7,
                  block_points=262144, assume_unit_w=True,
                  channels_last=True, out_dtype=None):
    """points: (B, 4, H*W), K: (B, 4, 4), T: (B, 4, 4)
       -> (B, H, W, 2)   (or (B, 2, H, W) if channels_last=False).

    assume_unit_w=True requires the 4th point row to be exactly 1.0 (true for
    monodepth2 BackprojectDepth output); set it False for arbitrary
    homogeneous points."""
    B, four, N = points.shape
    assert four == 4 and N == height * width
    out_dtype = jnp.dtype(points.dtype if out_dtype is None else out_dtype)

    # ---- Hoisted per-batch (tiny, 4x4) math, done once in plain XLA.
    # P = (K @ T)[:, :3, :], with the pixel normalisation folded into rows 0/1:
    #   final = (2/(W-1)) * cam_x / z - 1,  (2/(H-1)) * cam_y / z - 1.
    P = jnp.matmul(K, T)[:, :3, :].astype(jnp.float32)                # (B, 3, 4)
    scale = jnp.array([2.0 / (width - 1), 2.0 / (height - 1), 1.0],
                      dtype=jnp.float32)
    P = P * scale[None, :, None]
    P_flat = P.reshape(B * 12)     # 1-D SMEM operand (avoids 2-D SMEM padding)

    # ---- Lane/sublane-dense layout: (B, 4, S, 128).
    S = -(-N // _LANE)
    rows_cap = max(8, (block_points // _LANE) // 8 * 8)    # sublanes per step
    min_s_blocks = 2 if B == 1 else 1      # keep both v7x TensorCores busy
    ts, s_pad = _pick_tile(S, rows_cap, min_s_blocks)
    n_total = s_pad * _LANE
    if n_total != N:
        # Only hit when N is not a lane multiple / has no usable divisor.
        # Zero padding is safe: z = 0 + eps -> finite values, sliced out below.
        points = jnp.pad(points, ((0, 0), (0, 0), (0, n_total - N)))
    pts4 = points.reshape(B, 4, s_pad, _LANE)   # pure bitcast when unpadded

    in_planes = 3 if assume_unit_w else 4
    kernel = functools.partial(_project_depth_kernel, eps=float(eps),
                               unit_w=bool(assume_unit_w))

    flops_per_pt = 22 if assume_unit_w else 26
    cost = pl.CostEstimate(
        flops=flops_per_pt * B * n_total,
        transcendentals=B * n_total,
        bytes_accessed=(B * n_total * in_planes * points.dtype.itemsize
                        + B * n_total * 2 * out_dtype.itemsize
                        + B * 12 * 4),
    )

    out = pl.pallas_call(
        kernel,
        out_shape=jax.ShapeDtypeStruct((B, 2, s_pad, _LANE), out_dtype),
        grid_spec=pltpu.PrefetchScalarGridSpec(
            num_scalar_prefetch=0,
            grid=(B, s_pad // ts),
            in_specs=[
                # Pre-scaled projection matrices: whole 1-D array in SMEM.
                pl.BlockSpec(memory_space=pltpu.MemorySpace.SMEM),
                # Only the first 3 (or 4) planes of the (B, 4, s_pad, 128)
                # array are ever DMA'd; index_map stays at plane-block 0.
                pl.BlockSpec((1, in_planes, ts, _LANE),
                             lambda b, s: (b, 0, s, 0)),
            ],
            out_specs=pl.BlockSpec((1, 2, ts, _LANE), lambda b, s: (b, 0, s, 0)),
        ),
        compiler_params=pltpu.CompilerParams(
            dimension_semantics=("parallel", "parallel"),
            vmem_limit_bytes=32 * 1024 * 1024),
        cost_estimate=cost,
    )(P_flat, pts4)

    flat = out.reshape(B, 2, n_total)
    if n_total != N:
        flat = flat[:, :, :N]
    pix = flat.reshape(B, 2, height, width)
    if not channels_last:
        return pix   # (B, 2, H, W): avoids the extra HBM pass of the permute.
    # Matches the PyTorch permute(0, 2, 3, 1).  This transpose is a separate
    # XLA kernel that re-reads/re-writes the whole 2-channel output; prefer
    # channels_last=False if the consumer accepts channel-first.
    return jnp.transpose(pix, (0, 2, 3, 1))


def _reference(points, K, T, *, height, width, eps=1e-7):
    B = points.shape[0]
    P = jnp.matmul(K, T)[:, :3, :]
    cam = jnp.matmul(P, points)
    pix = cam[:, :2, :] / (cam[:, 2:3, :] + eps)
    pix = pix.reshape(B, 2, height, width).transpose(0, 2, 3, 1)
    pix = pix.at[..., 0].divide(width - 1)
    pix = pix.at[..., 1].divide(height - 1)
    return (pix - 0.5) * 2.0


if __name__ == "__main__":
    B, H, W = 2, 16, 16
    N = H * W
    key = jax.random.PRNGKey(0)
    k_xy, k_z, k_K, k_T = jax.random.split(key, 4)

    # Homogeneous point cloud (B, 4, H*W); positive depth so 1/z is
    # well-conditioned (as it is for real back-projected depth maps); w == 1
    # as produced by monodepth2 BackprojectDepth.
    xy = jax.random.normal(k_xy, (B, 2, N), dtype=jnp.float32)
    z = 1.0 + 2.0 * jax.random.uniform(k_z, (B, 1, N), dtype=jnp.float32)
    points = jnp.concatenate([xy, z, jnp.ones((B, 1, N), jnp.float32)], axis=1)

    # Deterministic intrinsics-like K (4x4) and extrinsics-like T (4x4).
    K_base = jnp.array([[0.58 * W, 0.0, 0.5 * W, 0.0],
                        [0.0, 1.92 * H, 0.5 * H, 0.0],
                        [0.0, 0.0, 1.0, 0.0],
                        [0.0, 0.0, 0.0, 1.0]], dtype=jnp.float32)
    K = jnp.broadcast_to(K_base, (B, 4, 4))
    K = K + 0.01 * jax.random.normal(k_K, (B, 4, 4), dtype=jnp.float32)

    T = jnp.broadcast_to(jnp.eye(4, dtype=jnp.float32), (B, 4, 4))
    T = T + 0.05 * jax.random.normal(k_T, (B, 4, 4), dtype=jnp.float32)

    ref = np.asarray(_reference(points, K, T, height=H, width=W))

    # Default path: unit-w (3-plane DMA), channels-last output.
    out_cl = project_depth(points, K, T, height=H, width=W)
    out_cl = jax.block_until_ready(out_cl)
    np.testing.assert_allclose(np.asarray(out_cl), ref, rtol=1e-4, atol=1e-4)

    # General path: full 4-plane homogeneous points, channel-first output.
    out_cf = project_depth(points, K, T, height=H, width=W,
                           assume_unit_w=False, channels_last=False)
    out_cf = jax.block_until_ready(out_cf)
    np.testing.assert_allclose(np.asarray(out_cf),
                               np.transpose(ref, (0, 3, 1, 2)),
                               rtol=1e-4, atol=1e-4)

    print("KERNEL_OK")
</pallas_src>

<mosaic_0001>
module attributes {stable_mosaic.version = 11 : i64} {
  func.func @_project_depth_kernel(%arg0: i32, %arg1: i32, %arg2: memref<24xf32, #tpu.memory_space<smem>>, %arg3: memref<1x3x2x128xf32, #tpu.memory_space<vmem>>, %arg4: memref<1x2x2x128xf32, #tpu.memory_space<vmem>>) attributes {dimension_semantics = [#tpu.dimension_semantics<parallel>, #tpu.dimension_semantics<parallel>], iteration_bounds = array<i64: 2, 1>, scalar_prefetch = 0 : i64, scratch_operands = 0 : i64, tpu.core_type = #tpu.core_type<tc>, window_params = [{transform_indices = @transform_0, window_bounds = array<i64: 24>}, {transform_indices = @transform_1, window_bounds = array<i64: 1, 3, 2, 128>}, {transform_indices = @transform_2, window_bounds = array<i64: 1, 2, 2, 128>}]} {
    %c12_i32 = arith.constant 12 : i32
    %0 = arith.muli %arg0, %c12_i32 : i32
    %c0 = arith.constant 0 : index
    %c0_0 = arith.constant 0 : index
    %c0_1 = arith.constant 0 : index
    %c0_2 = arith.constant 0 : index
    %1 = vector.load %arg3[%c0, %c0_0, %c0_1, %c0_2] : memref<1x3x2x128xf32, #tpu.memory_space<vmem>>, vector<1x1x2x128xf32>
    %2 = vector.shape_cast %1 : vector<1x1x2x128xf32> to vector<2x128xf32>
    %c0_3 = arith.constant 0 : index
    %c1 = arith.constant 1 : index
    %c0_4 = arith.constant 0 : index
    %c0_5 = arith.constant 0 : index
    %3 = vector.load %arg3[%c0_3, %c1, %c0_4, %c0_5] : memref<1x3x2x128xf32, #tpu.memory_space<vmem>>, vector<1x1x2x128xf32>
    %4 = vector.shape_cast %3 : vector<1x1x2x128xf32> to vector<2x128xf32>
    %c0_6 = arith.constant 0 : index
    %c2 = arith.constant 2 : index
    %c0_7 = arith.constant 0 : index
    %c0_8 = arith.constant 0 : index
    %5 = vector.load %arg3[%c0_6, %c2, %c0_7, %c0_8] : memref<1x3x2x128xf32, #tpu.memory_space<vmem>>, vector<1x1x2x128xf32>
    %6 = vector.shape_cast %5 : vector<1x1x2x128xf32> to vector<2x128xf32>
    %c8_i32 = arith.constant 8 : i32
    %7 = arith.addi %0, %c8_i32 : i32
    %8 = arith.index_cast %7 : i32 to index
    %9 = memref.load %arg2[%8] : memref<24xf32, #tpu.memory_space<smem>>
    %10 = vector.broadcast %9 : f32 to vector<2x128xf32>
    %11 = arith.mulf %10, %2 : vector<2x128xf32>
    %c9_i32 = arith.constant 9 : i32
    %12 = arith.addi %0, %c9_i32 : i32
    %13 = arith.index_cast %12 : i32 to index
    %14 = memref.load %arg2[%13] : memref<24xf32, #tpu.memory_space<smem>>
    %15 = vector.broadcast %14 : f32 to vector<2x128xf32>
    %16 = arith.mulf %15, %4 : vector<2x128xf32>
    %17 = arith.addf %11, %16 : vector<2x128xf32>
    %c10_i32 = arith.constant 10 : i32
    %18 = arith.addi %0, %c10_i32 : i32
    %19 = arith.index_cast %18 : i32 to index
    %20 = memref.load %arg2[%19] : memref<24xf32, #tpu.memory_space<smem>>
    %21 = vector.broadcast %20 : f32 to vector<2x128xf32>
    %22 = arith.mulf %21, %6 : vector<2x128xf32>
    %23 = arith.addf %17, %22 : vector<2x128xf32>
    %c11_i32 = arith.constant 11 : i32
    %24 = arith.addi %0, %c11_i32 : i32
    %25 = arith.index_cast %24 : i32 to index
    %26 = memref.load %arg2[%25] : memref<24xf32, #tpu.memory_space<smem>>
    %cst = arith.constant 1.000000e-07 : f32
    %27 = arith.addf %26, %cst : f32
    %28 = vector.broadcast %27 : f32 to vector<2x128xf32>
    %29 = arith.addf %23, %28 : vector<2x128xf32>
    %c0_i32 = arith.constant 0 : i32
    %30 = arith.addi %0, %c0_i32 : i32
    %31 = arith.index_cast %30 : i32 to index
    %32 = memref.load %arg2[%31] : memref<24xf32, #tpu.memory_space<smem>>
    %33 = vector.broadcast %32 : f32 to vector<2x128xf32>
    %34 = arith.mulf %33, %2 : vector<2x128xf32>
    %c1_i32 = arith.constant 1 : i32
    %35 = arith.addi %0, %c1_i32 : i32
    %36 = arith.index_cast %35 : i32 to index
    %37 = memref.load %arg2[%36] : memref<24xf32, #tpu.memory_space<smem>>
    %38 = vector.broadcast %37 : f32 to vector<2x128xf32>
    %39 = arith.mulf %38, %4 : vector<2x128xf32>
    %40 = arith.addf %34, %39 : vector<2x128xf32>
    %c2_i32 = arith.constant 2 : i32
    %41 = arith.addi %0, %c2_i32 : i32
    %42 = arith.index_cast %41 : i32 to index
    %43 = memref.load %arg2[%42] : memref<24xf32, #tpu.memory_space<smem>>
    %44 = vector.broadcast %43 : f32 to vector<2x128xf32>
    %45 = arith.mulf %44, %6 : vector<2x128xf32>
    %46 = arith.addf %40, %45 : vector<2x128xf32>
    %c3_i32 = arith.constant 3 : i32
    %47 = arith.addi %0, %c3_i32 : i32
    %48 = arith.index_cast %47 : i32 to index
    %49 = memref.load %arg2[%48] : memref<24xf32, #tpu.memory_space<smem>>
    %50 = vector.broadcast %49 : f32 to vector<2x128xf32>
    %51 = arith.addf %46, %50 : vector<2x128xf32>
    %c4_i32 = arith.constant 4 : i32
    %52 = arith.addi %0, %c4_i32 : i32
    %53 = arith.index_cast %52 : i32 to index
    %54 = memref.load %arg2[%53] : memref<24xf32, #tpu.memory_space<smem>>
    %55 = vector.broadcast %54 : f32 to vector<2x128xf32>
    %56 = arith.mulf %55, %2 : vector<2x128xf32>
    %c5_i32 = arith.constant 5 : i32
    %57 = arith.addi %0, %c5_i32 : i32
    %58 = arith.index_cast %57 : i32 to index
    %59 = memref.load %arg2[%58] : memref<24xf32, #tpu.memory_space<smem>>
    %60 = vector.broadcast %59 : f32 to vector<2x128xf32>
    %61 = arith.mulf %60, %4 : vector<2x128xf32>
    %62 = arith.addf %56, %61 : vector<2x128xf32>
    %c6_i32 = arith.constant 6 : i32
    %63 = arith.addi %0, %c6_i32 : i32
    %64 = arith.index_cast %63 : i32 to index
    %65 = memref.load %arg2[%64] : memref<24xf32, #tpu.memory_space<smem>>
    %66 = vector.broadcast %65 : f32 to vector<2x128xf32>
    %67 = arith.mulf %66, %6 : vector<2x128xf32>
    %68 = arith.addf %62, %67 : vector<2x128xf32>
    %c7_i32 = arith.constant 7 : i32
    %69 = arith.addi %0, %c7_i32 : i32
    %70 = arith.index_cast %69 : i32 to index
    %71 = memref.load %arg2[%70] : memref<24xf32, #tpu.memory_space<smem>>
    %72 = vector.broadcast %71 : f32 to vector<2x128xf32>
    %73 = arith.addf %68, %72 : vector<2x128xf32>
    %74 = tpu.reciprocal %29 : vector<2x128xf32> -> vector<2x128xf32>
    %75 = arith.mulf %51, %74 : vector<2x128xf32>
    %cst_9 = arith.constant 1.000000e+00 : f32
    %76 = vector.broadcast %cst_9 : f32 to vector<2x128xf32>
    %77 = arith.subf %75, %76 : vector<2x128xf32>
    %c0_10 = arith.constant 0 : index
    %c0_11 = arith.constant 0 : index
    %c0_12 = arith.constant 0 : index
    %c0_13 = arith.constant 0 : index
    %78 = vector.load %arg4[%c0_10, %c0_11, %c0_12, %c0_13] : memref<1x2x2x128xf32, #tpu.memory_space<vmem>>, vector<1x1x2x128xf32>
    %79 = vector.shape_cast %78 : vector<1x1x2x128xf32> to vector<2x128xf32>
    %80 = vector.shape_cast %77 : vector<2x128xf32> to vector<1x1x2x128xf32>
    tpu.vector_store %arg4[%c0_10, %c0_11, %c0_12, %c0_13], %80 {strides = array<i32>} : memref<1x2x2x128xf32, #tpu.memory_space<vmem>>, vector<1x1x2x128xf32>,
    %81 = arith.mulf %73, %74 : vector<2x128xf32>
    %cst_14 = arith.constant 1.000000e+00 : f32
    %82 = vector.broadcast %cst_14 : f32 to vector<2x128xf32>
    %83 = arith.subf %81, %82 : vector<2x128xf32>
    %c0_15 = arith.constant 0 : index
    %c1_16 = arith.constant 1 : index
    %c0_17 = arith.constant 0 : index
    %c0_18 = arith.constant 0 : index
    %84 = vector.load %arg4[%c0_15, %c1_16, %c0_17, %c0_18] : memref<1x2x2x128xf32, #tpu.memory_space<vmem>>, vector<1x1x2x128xf32>
    %85 = vector.shape_cast %84 : vector<1x1x2x128xf32> to vector<2x128xf32>
    %86 = vector.shape_cast %83 : vector<2x128xf32> to vector<1x1x2x128xf32>
    tpu.vector_store %arg4[%c0_15, %c1_16, %c0_17, %c0_18], %86 {strides = array<i32>} : memref<1x2x2x128xf32, #tpu.memory_space<vmem>>, vector<1x1x2x128xf32>,
    return
  }
  func.func @transform_0(%arg0: i32, %arg1: i32) -> i32 {
    %c0_i32 = arith.constant 0 : i32
    %c0_i32_0 = arith.constant 0 : i32
    return %c0_i32 : i32
  }
  func.func @transform_1(%arg0: i32, %arg1: i32) -> (i32, i32, i32, i32) {
    %c0_i32 = arith.constant 0 : i32
    %c0_i32_0 = arith.constant 0 : i32
    %c0_i32_1 = arith.constant 0 : i32
    return %arg0, %c0_i32, %arg1, %c0_i32_0 : i32, i32, i32, i32
  }
  func.func @transform_2(%arg0: i32, %arg1: i32) -> (i32, i32, i32, i32) {
    %c0_i32 = arith.constant 0 : i32
    %c0_i32_0 = arith.constant 0 : i32
    %c0_i32_1 = arith.constant 0 : i32
    return %arg0, %c0_i32, %arg1, %c0_i32_0 : i32, i32, i32, i32
  }
}

</mosaic_0001>

<llo_original>
// kernel: tpu_custom_call.1
$region0: #{tpu_custom_call.1}
  #allocation0 [shape = 'u32[]', space=smem, size = 0x4, offset = 0x4, fixed_abs, tag = 'smem constant byte address 0x4 - core index']
  #allocation1 [shape = 'u32[144,128]{1,0:T(1,128)}', space=vmem, size = 0x12000, scoped, tag = 'internal scratch']
  %s0 = inlined_call_operand.hbm [shape: f32[24], index: 0, kind: input, shape index: {}]
  %s1 = inlined_call_operand.hbm [shape: f32[2,4,2,128], index: 1, kind: input, shape index: {}]
  %s2 = inlined_call_operand.hbm [shape: f32[2,2,2,128], index: 2, kind: output, shape index: {}]
  %s3 = sld [smem:[#allocation0]]
  $region49: #{tpu_custom_call.1} parent=0
    _
  %s5 = ssub.s32 1, %s3
  %s6 = scalar_select 0, %s5, %s3
  $region1: #{tpu_custom_call.1} parent=0
    #allocation2 [shape = 'u8[512]{0}', space=smem, size = 0x200, scoped, tag = 'input window, operand 0, single buffered']
    #allocation3 [shape = 's32[2]{0}', space=sflag, size = 0x8, scoped, tag = 'scoped memory for tpu_custom_call.1']
    #allocation4 [shape = 's32[2]{0}', space=sflag, size = 0x8, scoped, tag = 'scoped memory for tpu_custom_call.1']
    #allocation5 [shape = 's32[2]{0}', space=sflag, size = 0x8, scoped, tag = 'scoped memory for tpu_custom_call.1']
    #allocation6 [shape = 'u8[6144]{0}', space=vmem, size = 0x1800, scoped, tag = 'input window, operand 1']
    #allocation7 [shape = 'u8[4096]{0}', space=vmem, size = 0x1000, scoped, tag = 'output window, operand 0']
    %7 = vsyncpa [#allocation5], 0
    %8 = vsyncpa [#allocation3], 0
    %s9 = scalar_lea.sflag [#allocation3], 1
    %10 = vsyncpa %s9, 0
    %11 = vsyncpa [#allocation4], 0
    %s12 = scalar_lea.sflag [#allocation4], 1
    %13 = vsyncpa %s12, 0
    loop: start=0, step=1, limit=4
    $region2: #{tpu_custom_call.1} parent=1 // loop_pre_header
      _
    $region3: #{tpu_custom_call.1} parent=1 // loop_header
      %s15 = sphi 0, %s19
      %p16 = scmp.ge.s32.totalorder %s15, 4
      %s22 = sphi 0, %s34
      %s23 = sphi 0, %s30
      %s24 = sphi 0, %s22
      %s25 = sphi 0, %s23
      %s26 = sphi 0, %s24
      %s27 = sphi 0, %s25
      %s35 = sphi 0, %s35
      %s37 = sphi 0, %s35
      %s38 = sphi 0, %s37
      %s52 = sphi 0, %s38
      %s60 = sphi 0, %s62
      %s63 = sphi 0, %s60
      %s64 = sphi 0, %s63
      %s80 = sphi 0, %s64
      %s88 = sphi 0, %s90
      %s91 = sphi 0, %s88
      %s92 = sphi 0, %s91
      %s108 = sphi 0, %s92
    $region4: #{tpu_custom_call.1} parent=1 // loop_header_branch
      %18 = sbr.rel (%p16) target = $region8
    $region5: #{tpu_custom_call.1} parent=1 // loop_body
      %s20 = ssub.s32 %s15, 1
      %s21 = ssub.s32 %s15, 2
      %s28 = sadd.s32 1, %s23
      %p29 = scmp.ge.s32.totalorder %s28, 1
      %s30 = scalar_select %p29, 0, %s28
      %s31 = sadd.s32 1, %s22
      %s32 = scalar_select %p29, %s31, %s22
      %p33 = scmp.ge.s32.totalorder %s32, 2
      %s34 = scalar_select %p33, 0, %s32
      %s36 = sadd.s32 %s35, 1
      %p39 = scmp.eq.s32.totalorder %s15, 1
      %p40 = scmp.ne.s32.totalorder %s35, %s37
      %p41 = scmp.eq.s32.totalorder %s15, 0
      %p42 = por %p40, %p41
      %p43 = scmp.ne.s32.totalorder %s35, %s37
      %p44 = scmp.eq.s32.totalorder %s20, 1
      %p45 = por %p43, %p44
      %p46 = scmp.ne.s32.totalorder %s37, %s38
      %p47 = scmp.eq.s32.totalorder %s20, 0
      %p48 = por %p46, %p47
      %p49 = scmp.ne.s32.totalorder %s37, %s38
      %p50 = scmp.eq.s32.totalorder %s21, 1
      %p51 = por %p49, %p50
      %p53 = scmp.ne.s32.totalorder %s38, %s52
      %p54 = scmp.eq.s32.totalorder %s21, 0
      %p55 = por %p53, %p54
      %s56 = ssub.s32 %s22, %s34
      %s57 = ssub.s32 %s23, %s30
      %s58 = sor.u32 %s56, %s57
      %p59 = scmp.eq.s32.totalorder %s58, 0
      %s61 = sadd.s32 %s60, 1
      %s62 = scalar_select %p59, %s60, %s61
      %p65 = pneg %p59
      %p66 = scmp.eq.s32.totalorder %s15, 1
      %p67 = por %p65, %p66
      %p68 = scmp.ne.s32.totalorder %s60, %s63
      %p69 = scmp.eq.s32.totalorder %s15, 0
      %p70 = por %p68, %p69
      %p71 = scmp.ne.s32.totalorder %s60, %s63
      %p72 = scmp.eq.s32.totalorder %s20, 1
      %p73 = por %p71, %p72
      %p74 = scmp.ne.s32.totalorder %s63, %s64
      %p75 = scmp.eq.s32.totalorder %s20, 0
      %p76 = por %p74, %p75
      %p77 = scmp.ne.s32.totalorder %s63, %s64
      %p78 = scmp.eq.s32.totalorder %s21, 1
      %p79 = por %p77, %p78
      %p81 = scmp.ne.s32.totalorder %s64, %s80
      %p82 = scmp.eq.s32.totalorder %s21, 0
      %p83 = por %p81, %p82
      %s84 = ssub.s32 %s22, %s34
      %s85 = ssub.s32 %s23, %s30
      %s86 = sor.u32 %s84, %s85
      %p87 = scmp.eq.s32.totalorder %s86, 0
      %s89 = sadd.s32 %s88, 1
      %s90 = scalar_select %p87, %s88, %s89
      %p93 = pneg %p87
      %p94 = scmp.eq.s32.totalorder %s15, 1
      %p95 = por %p93, %p94
      %p96 = scmp.ne.s32.totalorder %s88, %s91
      %p97 = scmp.eq.s32.totalorder %s15, 0
      %p98 = por %p96, %p97
      %p99 = scmp.ne.s32.totalorder %s88, %s91
      %p100 = scmp.eq.s32.totalorder %s20, 1
      %p101 = por %p99, %p100
      %p102 = scmp.ne.s32.totalorder %s91, %s92
      %p103 = scmp.eq.s32.totalorder %s20, 0
      %p104 = por %p102, %p103
      %p105 = scmp.ne.s32.totalorder %s91, %s92
      %p106 = scmp.eq.s32.totalorder %s21, 1
      %p107 = por %p105, %p106
      %p109 = scmp.ne.s32.totalorder %s92, %s108
      %p110 = scmp.eq.s32.totalorder %s21, 0
      %p111 = por %p109, %p110
      %p112 = scmp.le.s32.totalorder 1, %s15
      %p113 = scmp.lt.s32.totalorder %s15, 3
      %p114 = pnand %p112, %p113
      %p115 = pneg %p114
      // Predicated region
      $region9: #{tpu_custom_call.1} parent=5 // pred_check
        _
      $region10: #{tpu_custom_call.1} parent=5 // pred_check_branch
        %117 = sbr.rel (%p114) target = $region12
      $region11: #{tpu_custom_call.1} parent=5 // pred_region
        %s118 = ssub.s32 %s15, 1
        // Predicated region
        $region13: #{tpu_custom_call.1} parent=11 // pred_check
          %p119 = pneg %p48
        $region14: #{tpu_custom_call.1} parent=11 // pred_check_branch
          %121 = sbr.rel (%p119) target = $region16
        $region15: #{tpu_custom_call.1} parent=11 // pred_region
          %s123 = ssub.s32 16, 16
          %124 = vsyncadd [#allocation5], %s123
          %127 = dma.hbm_to_smem %s0, 16, [#allocation2], [#allocation5]
        $region16: #{tpu_custom_call.1} parent=11 // pred_fallthru
          _
      $region12: #{tpu_custom_call.1} parent=5 // pred_fallthru
        _
      %p128 = scmp.lt.s32.totalorder %s15, 2
      // Predicated region
      $region17: #{tpu_custom_call.1} parent=5 // pred_check
        %p129 = pneg %p128
      $region18: #{tpu_custom_call.1} parent=5 // pred_check_branch
        %131 = sbr.rel (%p129) target = $region20
      $region19: #{tpu_custom_call.1} parent=5 // pred_region
        // Predicated region
        $region21: #{tpu_custom_call.1} parent=19 // pred_check
          %p132 = pneg %p70
        $region22: #{tpu_custom_call.1} parent=19 // pred_check_branch
          %134 = sbr.rel (%p132) target = $region24
        $region23: #{tpu_custom_call.1} parent=19 // pred_region
          %s135 = sand.u32 %s60, 1
          %s136 = scalar_lea.sflag [#allocation3], %s135
          %s137 = sand.u32 %s60, 1
          %s138 = smul.addr %s137, 6
          %s139 = scalar_lea.vmem [#allocation6], %s138
          %s141 = ssub.s32 96, 96
          %142 = vsyncadd %s136, %s141
          %s143 = smul.addr %s22, 4
          %s144 = sadd.s32 %s23, %s143
          %s145 = smul.addr %s144, 32
          %s146 = scalar_lea.hbm %s1, %s145
          %s147 = sshll.u32 %s139, 4
          %s148 = int_to_ptr.vmem [resolvable:$true] %s147
          %153 = dma.hbm_to_vmem [thread:$0]  %s146, 96, %s148, %s136, 32, 32, 2
        $region24: #{tpu_custom_call.1} parent=19 // pred_fallthru
          _
      $region20: #{tpu_custom_call.1} parent=5 // pred_fallthru
        _
      %p154 = scmp.le.s32.totalorder 1, %s15
      %p155 = scmp.lt.s32.totalorder %s15, 3
      %p156 = pnand %p154, %p155
      %p157 = pneg %p156
      // Predicated region
      $region25: #{tpu_custom_call.1} parent=5 // pred_check
        _
      $region26: #{tpu_custom_call.1} parent=5 // pred_check_branch
        %159 = sbr.rel (%p156) target = $region28
      $region27: #{tpu_custom_call.1} parent=5 // pred_region
        %s160 = ssub.s32 %s15, 1
        // Predicated region
        $region29: #{tpu_custom_call.1} parent=27 // pred_check
          %p161 = pneg %p48
        $region30: #{tpu_custom_call.1} parent=27 // pred_check_branch
          %163 = sbr.rel (%p161) target = $region32
        $region31: #{tpu_custom_call.1} parent=27 // pred_region
          %164 = dma.done [#allocation5], 16
        $region32: #{tpu_custom_call.1} parent=27 // pred_fallthru
          _
        %s165 = sand.u32 %s63, 1
        %s166 = scalar_lea.sflag [#allocation3], %s165
        %s167 = sand.u32 %s63, 1
        %s168 = smul.addr %s167, 6
        %s169 = scalar_lea.vmem [#allocation6], %s168
        // Predicated region
        $region33: #{tpu_custom_call.1} parent=27 // pred_check
          %p170 = pneg %p76
        $region34: #{tpu_custom_call.1} parent=27 // pred_check_branch
          %172 = sbr.rel (%p170) target = $region36
        $region35: #{tpu_custom_call.1} parent=27 // pred_region
          %173 = dma.done %s166, 96
        $region36: #{tpu_custom_call.1} parent=27 // pred_fallthru
          _
        %174 = sfence
        %p175 = pneg %p48
        %p176 = pneg %p45
        %s177 = sand.u32 %s63, 1
        %s178 = scalar_lea.sflag [#allocation3], %s177
        %s179 = sand.u32 %s63, 1
        %s180 = smul.addr %s179, 6
        %s181 = scalar_lea.vmem [#allocation6], %s180
        %p182 = pneg %p76
        %p183 = pneg %p73
        %p184 = pneg %p104
        %p185 = pneg %p101
        %s186 = sand.u32 %s91, 1
        %s187 = scalar_lea.sflag [#allocation4], %s186
        %s188 = sand.u32 %s91, 1
        %s189 = smul.addr %s188, 4
        %s190 = scalar_lea.vmem [#allocation7], %s189
        %s191 = smul.u32 %s24, 12
        %v192 = vld [vmem:[%s169] sm:$0x3]
        %s193 = scalar_lea.vmem %s169, 2 [#allocation6]
        %v194 = vld [vmem:[%s193] sm:$0x3]
        %s195 = scalar_lea.vmem %s169, 4 [#allocation6]
        %v196 = vld [vmem:[%s195] sm:$0x3]
        %s197 = sadd.s32 %s191, 8
        %s198 = sld [smem:[#allocation2 + %s197]]
        %v199 = vstv %s198
        %v200 = vmul.f32 %v199, %v192
        %s201 = sadd.s32 %s191, 9
        %s202 = sld [smem:[#allocation2 + %s201]]
        %v203 = vstv %s202
        %v204 = vmul.f32 %v203, %v194
        %v205 = vadd.f32 %v200, %v204
        %s206 = sadd.s32 %s191, 10
        %s207 = sld [smem:[#allocation2 + %s206]]
        %v208 = vstv %s207
        %v209 = vmul.f32 %v208, %v196
        %v210 = vadd.f32 %v205, %v209
        %s211 = sadd.s32 %s191, 11
        %s212 = sld [smem:[#allocation2 + %s211]]
        %s213 = sadd.f32 %s212, 1e-07
        %v214 = vstv %s213
        %v215 = vadd.f32 %v210, %v214
        %s216 = sld [smem:[#allocation2 + %s191]]
        %v217 = vstv %s216
        %v218 = vmul.f32 %v217, %v192
        %s219 = sadd.s32 %s191, 1
        %s220 = sld [smem:[#allocation2 + %s219]]
        %v221 = vstv %s220
        %v222 = vmul.f32 %v221, %v194
        %v223 = vadd.f32 %v218, %v222
        %s224 = sadd.s32 %s191, 2
        %s225 = sld [smem:[#allocation2 + %s224]]
        %v226 = vstv %s225
        %v227 = vmul.f32 %v226, %v196
        %v228 = vadd.f32 %v223, %v227
        %s229 = sadd.s32 %s191, 3
        %s230 = sld [smem:[#allocation2 + %s229]]
        %v231 = vstv %s230
        %v232 = vadd.f32 %v228, %v231
        %s233 = sadd.s32 %s191, 4
        %s234 = sld [smem:[#allocation2 + %s233]]
        %v235 = vstv %s234
        %v236 = vmul.f32 %v235, %v192
        %s237 = sadd.s32 %s191, 5
        %s238 = sld [smem:[#allocation2 + %s237]]
        %v239 = vstv %s238
        %v240 = vmul.f32 %v239, %v194
        %v241 = vadd.f32 %v236, %v240
        %s242 = sadd.s32 %s191, 6
        %s243 = sld [smem:[#allocation2 + %s242]]
        %v244 = vstv %s243
        %v245 = vmul.f32 %v244, %v196
        %v246 = vadd.f32 %v241, %v245
        %s247 = sadd.s32 %s191, 7
        %s248 = sld [smem:[#allocation2 + %s247]]
        %v249 = vstv %s248
        %v250 = vadd.f32 %v246, %v249
        %v251 = vrcp.pop %v215
        %v252 = vmul.f32 %v232, %v251
        %v253 = vsub.f32 %v252, 1.0
        %254 = vst [vmem:[%s190] sm:$0x3] %v253
        %v255 = vmul.f32 %v250, %v251
        %v256 = vsub.f32 %v255, 1.0
        %s257 = scalar_lea.vmem %s190, 2 [#allocation7]
        %258 = vst [vmem:[%s257] sm:$0x3] %v256
        %s259 = sand.u32 %s91, 1
        %s260 = scalar_lea.sflag [#allocation4], %s259
        %s261 = sand.u32 %s91, 1
        %s262 = smul.addr %s261, 4
        %s263 = scalar_lea.vmem [#allocation7], %s262
        // Predicated region
        $region37: #{tpu_custom_call.1} parent=27 // pred_check
          %p264 = pneg %p101
        $region38: #{tpu_custom_call.1} parent=27 // pred_check_branch
          %266 = sbr.rel (%p264) target = $region40
        $region39: #{tpu_custom_call.1} parent=27 // pred_region
          %s268 = ssub.s32 64, 64
          %269 = vsyncadd %s260, %s268
          %s270 = smul.addr %s24, 2
          %s271 = sadd.s32 %s25, %s270
          %s272 = smul.addr %s271, 32
          %s273 = scalar_lea.hbm %s2, %s272
          %s274 = sshll.u32 %s263, 4
          %s275 = int_to_ptr.vmem [resolvable:$true] %s274
          %280 = dma.vmem_to_hbm [thread:$0]  %s275, 64, %s273, %s260, 32, 32, 2
        $region40: #{tpu_custom_call.1} parent=27 // pred_fallthru
          _
      $region28: #{tpu_custom_call.1} parent=5 // pred_fallthru
        _
      %p281 = scmp.le.s32.totalorder 2, %s15
      // Predicated region
      $region41: #{tpu_custom_call.1} parent=5 // pred_check
        %p282 = pneg %p281
      $region42: #{tpu_custom_call.1} parent=5 // pred_check_branch
        %284 = sbr.rel (%p282) target = $region44
      $region43: #{tpu_custom_call.1} parent=5 // pred_region
        %s285 = ssub.s32 %s15, 2
        // Predicated region
        $region45: #{tpu_custom_call.1} parent=43 // pred_check
          %p286 = pneg %p107
        $region46: #{tpu_custom_call.1} parent=43 // pred_check_branch
          %288 = sbr.rel (%p286) target = $region48
        $region47: #{tpu_custom_call.1} parent=43 // pred_region
          %s289 = sand.u32 %s92, 1
          %s290 = scalar_lea.sflag [#allocation4], %s289
          %s291 = sand.u32 %s92, 1
          %s292 = smul.addr %s291, 4
          %s293 = scalar_lea.vmem [#allocation7], %s292
          %294 = dma.done %s290, 64
        $region48: #{tpu_custom_call.1} parent=43 // pred_fallthru
          _
      $region44: #{tpu_custom_call.1} parent=5 // pred_fallthru
        _
    $region6: #{tpu_custom_call.1} parent=1 // loop_footer
      %s19 = sadd.s32 1, %s15
    $region7: #{tpu_custom_call.1} parent=1 // loop_footer_branch
      %14 = sbr.rel target = $region3
    $region8: #{tpu_custom_call.1} parent=1 // loop_exit
      _
    %295 = vsyncpa [#allocation3], 1
    %s296 = scalar_lea.sflag [#allocation3], 1
    %297 = vsyncpa %s296, 1
    %298 = vsyncpa [#allocation4], 1
    %s299 = scalar_lea.sflag [#allocation4], 1
    %300 = vsyncpa %s299, 1
    %301 = vsyncpa [#allocation5], 1
    %s302 = scalar_lea.sflag [#allocation5], 1
    %303 = vsyncpa %s302, 1

</llo_original>
